<compile_context>
chip_gen: v5e
topology: v5e:2x2
jax: 0.10.0
libtpu: 0.0.40
codegen_flags: <defaults>
</compile_context>

<pallas_src>
import math

import jax
import jax.numpy as jnp
from jax.experimental import pallas as pl
from jax.experimental.pallas import tpu as pltpu


# ----------------------------- configuration --------------------------------
B = 8            # batch
INPUT_DIM = 64
HIDDEN1 = 64
HIDDEN2 = 32
LATENT = 16
IW_SAMPLES = 5   # K

LOG2PI = math.log(2.0 * math.pi)

# ----- packed-slab layout (row offsets; all multiples of 8 => tile-aligned) --
# slab32: lane width 32
S32_W2, S32_WMULV, S32_WD1 = 0, 64, 96
S32_B2, S32_BMULV, S32_BD1 = 112, 120, 128
S32_ROWS = 136
# slab64: lane width 64
S64_W1, S64_WD2, S64_B1, S64_BD2 = 0, 64, 96, 104
S64_ROWS = 112
# slab128: lane width 128
S128_WREC, S128_BREC = 0, 64
S128_ROWS = 72


# ------------------------------- the kernel ---------------------------------
def _iwae_kernel(x_ref, eps_ref, s32_ref, s64_ref, s128_ref,
                 rec_ref, mulv_ref, loss_ref):
    f32 = jnp.float32

    Bsz, D = x_ref.shape          # (8, 64)
    KB, L = eps_ref.shape         # (40, 16), k-major rows
    K = KB // Bsz

    x = x_ref[...]                # (B, D)
    eps = eps_ref[...]            # (K*B, L)

    # ---- static, tile-aligned views into the packed parameter slabs ----
    w1    = s64_ref[S64_W1:S64_W1 + INPUT_DIM, :]          # (64, 64)
    wd2   = s64_ref[S64_WD2:S64_WD2 + HIDDEN2, :]          # (32, 64)
    b1    = s64_ref[S64_B1:S64_B1 + 1, :]                  # (1, 64)
    bd2   = s64_ref[S64_BD2:S64_BD2 + 1, :]                # (1, 64)

    w2    = s32_ref[S32_W2:S32_W2 + HIDDEN1, :]            # (64, 32)
    wmulv = s32_ref[S32_WMULV:S32_WMULV + HIDDEN2, :]      # (32, 32) fused mu|lv
    wd1   = s32_ref[S32_WD1:S32_WD1 + LATENT, :]           # (16, 32)
    b2    = s32_ref[S32_B2:S32_B2 + 1, :]
    bmulv = s32_ref[S32_BMULV:S32_BMULV + 1, :]
    bd1   = s32_ref[S32_BD1:S32_BD1 + 1, :]

    wrec  = s128_ref[S128_WREC:S128_WREC + HIDDEN1, :]     # (64, 128) fused rmu|rlv
    brec  = s128_ref[S128_BREC:S128_BREC + 1, :]           # (1, 128)

    # ---- encoder ----
    h = jnp.maximum(jnp.dot(x, w1, preferred_element_type=f32) + b1, 0.0)
    h = jnp.maximum(jnp.dot(h, w2, preferred_element_type=f32) + b2, 0.0)
    mulv = jnp.dot(h, wmulv, preferred_element_type=f32) + bmulv     # (B, 2L)
    mu = mulv[:, :L]
    logvar = mulv[:, L:]
    std = jnp.exp(0.5 * logvar)

    # ---- reparameterize all K samples via leading-dim broadcast (no concats) --
    eps3 = eps.reshape(K, Bsz, L)                                    # free reshape
    z3 = mu[None, :, :] + eps3 * std[None, :, :]                     # (K, B, L)
    z = z3.reshape(K * Bsz, L)                                       # free reshape

    # ---- single batched decoder pass over all K*B rows ----
    hd = jnp.maximum(jnp.dot(z, wd1, preferred_element_type=f32) + bd1, 0.0)
    hd = jnp.tanh(jnp.dot(hd, wd2, preferred_element_type=f32) + bd2)
    rec = jnp.dot(hd, wrec, preferred_element_type=f32) + brec       # (K*B, 2D)

    # ---- fused, lane-dense outputs (split in the wrapper) ----
    rec_ref[...] = rec[:Bsz]      # (B, 2D): k=0 recon_mu | recon_logvar, 128 lanes
    mulv_ref[...] = mulv          # (B, 2L): mu | logvar

    # ---- importance weights (constants folded, reduces merged) ----
    rec3 = rec.reshape(K, Bsz, 2 * D)                                # free reshape
    rmu3 = rec3[..., :D]
    rlv3 = rec3[..., D:]
    diff3 = x[None, :, :] - rmu3

    # recon_lp = -0.5*sum(rlv + diff^2*exp(-rlv)) - 0.5*D*log2pi
    recon_core = (rlv3 + diff3 * diff3 * jnp.exp(-rlv3)).sum(-1, keepdims=True)
    # log_pz - log_qz = 0.5*(sum(eps^2 - z^2) + sum(logvar))  (log2pi cancels;
    # (z-mu)^2/exp(logvar) == eps^2 exactly, so no exp / divide needed)
    pq_core = (eps3 * eps3 - z3 * z3).sum(-1, keepdims=True)         # (K, B, 1)
    lv_sum = logvar.sum(-1, keepdims=True)                           # (B, 1)

    log_w = (-0.5 * recon_core
             + 0.5 * (pq_core + lv_sum[None, :, :])
             - (0.5 * D) * LOG2PI)                                   # (K, B, 1)

    # ---- online logsumexp over K (unrolled static slices, pure VPU/EUP) ----
    m = log_w[0]
    for k in range(1, K):
        m = jnp.maximum(m, log_w[k])
    s = jnp.exp(log_w[0] - m)
    for k in range(1, K):
        s = s + jnp.exp(log_w[k] - m)
    log_weights = m + jnp.log(s) - math.log(K)                       # (B, 1)

    # scalar loss -> SMEM
    loss_ref[0, 0] = -jnp.sum(log_weights) / f32(Bsz)


# ------------------------- parameter packing (once) --------------------------
def pack_params(params):
    """Fuse paired projections and pack all weights/biases into 3 f32 slabs.

    Runs once at init time (NOT on the forward path).
    """
    f32 = jnp.float32

    def put(slab, arr, row):
        arr = arr.astype(f32)
        return slab.at[row:row + arr.shape[0], :arr.shape[1]].set(arr)

    w_mulv = jnp.concatenate([params["wmu"], params["wlv"]], axis=1)   # (H2, 2L)
    b_mulv = jnp.concatenate([params["bmu"], params["blv"]], axis=1)   # (1, 2L)
    w_rec = jnp.concatenate([params["wrm"], params["wrl"]], axis=1)    # (H1, 2D)
    b_rec = jnp.concatenate([params["brm"], params["brl"]], axis=1)    # (1, 2D)

    s32 = jnp.zeros((S32_ROWS, HIDDEN2), f32)
    s32 = put(s32, params["w2"], S32_W2)
    s32 = put(s32, w_mulv, S32_WMULV)
    s32 = put(s32, params["wd1"], S32_WD1)
    s32 = put(s32, params["b2"], S32_B2)
    s32 = put(s32, b_mulv, S32_BMULV)
    s32 = put(s32, params["bd1"], S32_BD1)

    s64 = jnp.zeros((S64_ROWS, HIDDEN1), f32)
    s64 = put(s64, params["w1"], S64_W1)
    s64 = put(s64, params["wd2"], S64_WD2)
    s64 = put(s64, params["b1"], S64_B1)
    s64 = put(s64, params["bd2"], S64_BD2)

    s128 = jnp.zeros((S128_ROWS, 2 * INPUT_DIM), f32)
    s128 = put(s128, w_rec, S128_WREC)
    s128 = put(s128, b_rec, S128_BREC)

    return s32, s64, s128


# ------------------------------- wrapper -------------------------------------
@jax.jit
def iwae_forward(x, eps, packed):
    """x: (B, D_in); eps: (K, B, L); packed: output of pack_params."""
    s32, s64, s128 = packed
    Bsz, d_in = x.shape
    K, _, lat = eps.shape
    f32 = jnp.float32

    eps_flat = eps.reshape(K * Bsz, lat)   # k-major rows; free reshape

    vspec = pl.BlockSpec(memory_space=pltpu.MemorySpace.VMEM)
    sspec = pl.BlockSpec(memory_space=pltpu.MemorySpace.SMEM)

    out_shape = (
        jax.ShapeDtypeStruct((Bsz, 2 * d_in), f32),   # fused recon_mu | recon_logvar (k=0)
        jax.ShapeDtypeStruct((Bsz, 2 * lat), f32),    # fused mu | logvar
        jax.ShapeDtypeStruct((1, 1), f32),            # loss (SMEM)
    )

    rec, mulv, loss = pl.pallas_call(
        _iwae_kernel,
        out_shape=out_shape,
        in_specs=[vspec] * 5,
        out_specs=(vspec, vspec, sspec),
    )(x, eps_flat, s32, s64, s128)

    recon_mu = rec[:, :d_in]
    recon_lv = rec[:, d_in:]
    mu = mulv[:, :lat]
    logvar = mulv[:, lat:]
    return recon_mu, recon_lv, mu, logvar, loss[0, 0]


# --------------------------- pure-JAX reference ------------------------------
def iwae_reference(x, eps, params, *, iw_samples=IW_SAMPLES):
    f32 = jnp.float32
    log2pi = jnp.log(2.0 * jnp.pi)
    relu = lambda v: jnp.maximum(v, 0.0)

    h = relu(x @ params["w1"] + params["b1"])
    h = relu(h @ params["w2"] + params["b2"])
    mu = h @ params["wmu"] + params["bmu"]
    logvar = h @ params["wlv"] + params["blv"]
    std = jnp.exp(0.5 * logvar)

    # eps: (K, B, L) -> z: (B, K, L)
    z = mu[:, None, :] + jnp.transpose(eps, (1, 0, 2)) * std[:, None, :]
    zf = z.reshape(-1, z.shape[-1])
    hd = relu(zf @ params["wd1"] + params["bd1"])
    hd = jnp.tanh(hd @ params["wd2"] + params["bd2"])
    rmu = (hd @ params["wrm"] + params["brm"]).reshape(x.shape[0], iw_samples, -1)
    rlv = (hd @ params["wrl"] + params["brl"]).reshape(x.shape[0], iw_samples, -1)

    recon_log_prob = (-0.5 * (log2pi + rlv
                              + (x[:, None, :] - rmu) ** 2 / jnp.exp(rlv))).sum(-1)
    log_pz = (-0.5 * (z ** 2 + log2pi)).sum(-1)
    log_qz = (-0.5 * ((z - mu[:, None, :]) ** 2 / jnp.exp(logvar)[:, None, :]
                      + logvar[:, None, :] + log2pi)).sum(-1)
    log_w = recon_log_prob + log_pz - log_qz
    log_weights = jax.scipy.special.logsumexp(log_w, axis=1) - jnp.log(f32(iw_samples))
    loss = -jnp.mean(log_weights)
    return rmu[:, 0, :], rlv[:, 0, :], mu, logvar, loss


# ----------------------------- param init ------------------------------------
def _linear_params(key, fan_in, fan_out):
    kw, kb = jax.random.split(key)
    bound = 1.0 / jnp.sqrt(jnp.float32(fan_in))
    w = jax.random.uniform(kw, (fan_in, fan_out), jnp.float32, -bound, bound)
    b = jax.random.uniform(kb, (1, fan_out), jnp.float32, -bound, bound)
    return w, b


def init_params(key):
    keys = jax.random.split(key, 8)
    p = {}
    p["w1"], p["b1"] = _linear_params(keys[0], INPUT_DIM, HIDDEN1)
    p["w2"], p["b2"] = _linear_params(keys[1], HIDDEN1, HIDDEN2)
    p["wmu"], p["bmu"] = _linear_params(keys[2], HIDDEN2, LATENT)
    p["wlv"], p["blv"] = _linear_params(keys[3], HIDDEN2, LATENT)
    p["wd1"], p["bd1"] = _linear_params(keys[4], LATENT, HIDDEN2)
    p["wd2"], p["bd2"] = _linear_params(keys[5], HIDDEN2, HIDDEN1)
    p["wrm"], p["brm"] = _linear_params(keys[6], HIDDEN1, INPUT_DIM)
    p["wrl"], p["brl"] = _linear_params(keys[7], HIDDEN1, INPUT_DIM)
    return p


# --------------------------------- main ---------------------------------------
if __name__ == "__main__":
    root = jax.random.PRNGKey(0)
    k_x, k_eps, k_p = jax.random.split(root, 3)

    x = jax.random.normal(k_x, (B, INPUT_DIM), jnp.float32)
    # eps plays the role of torch.randn_like(std); shaped (K, B, L).
    eps = jax.random.normal(k_eps, (IW_SAMPLES, B, LATENT), jnp.float32)
    params = init_params(k_p)

    # one-time packing (off the forward path)
    packed = jax.block_until_ready(pack_params(params))

    outs = iwae_forward(x, eps, packed)
    outs = jax.block_until_ready(outs)

    refs = iwae_reference(x, eps, params)
    names = ["recon_mu", "recon_logvar", "mu", "logvar", "loss"]
    for name, got, want in zip(names, outs, refs):
        if not jnp.allclose(got, want, rtol=1e-4, atol=1e-4):
            raise AssertionError(f"mismatch in {name}")

    print("KERNEL_OK")
</pallas_src>

<mosaic_0001>
module attributes {stable_mosaic.version = 11 : i64} {
  func.func @_iwae_kernel(%arg0: memref<8x64xf32, #tpu.memory_space<vmem>>, %arg1: memref<40x16xf32, #tpu.memory_space<vmem>>, %arg2: memref<136x32xf32, #tpu.memory_space<vmem>>, %arg3: memref<112x64xf32, #tpu.memory_space<vmem>>, %arg4: memref<72x128xf32, #tpu.memory_space<vmem>>, %arg5: memref<8x128xf32, #tpu.memory_space<vmem>>, %arg6: memref<8x32xf32, #tpu.memory_space<vmem>>, %arg7: memref<1x1xf32, #tpu.memory_space<smem>>) attributes {dimension_semantics = [], scalar_prefetch = 0 : i64, scratch_operands = 0 : i64, tpu.core_type = #tpu.core_type<tc>} {
    %c0 = arith.constant 0 : index
    %c0_0 = arith.constant 0 : index
    %0 = vector.load %arg0[%c0, %c0_0] : memref<8x64xf32, #tpu.memory_space<vmem>>, vector<8x64xf32>
    %c0_1 = arith.constant 0 : index
    %c0_2 = arith.constant 0 : index
    %1 = vector.load %arg1[%c0_1, %c0_2] : memref<40x16xf32, #tpu.memory_space<vmem>>, vector<40x16xf32>
    %c0_3 = arith.constant 0 : index
    %c0_4 = arith.constant 0 : index
    %2 = vector.load %arg3[%c0_3, %c0_4] : memref<112x64xf32, #tpu.memory_space<vmem>>, vector<64x64xf32>
    %c64 = arith.constant 64 : index
    %c0_5 = arith.constant 0 : index
    %3 = vector.load %arg3[%c64, %c0_5] : memref<112x64xf32, #tpu.memory_space<vmem>>, vector<32x64xf32>
    %c96 = arith.constant 96 : index
    %c0_6 = arith.constant 0 : index
    %4 = vector.load %arg3[%c96, %c0_6] : memref<112x64xf32, #tpu.memory_space<vmem>>, vector<1x64xf32>
    %c104 = arith.constant 104 : index
    %c0_7 = arith.constant 0 : index
    %5 = vector.load %arg3[%c104, %c0_7] : memref<112x64xf32, #tpu.memory_space<vmem>>, vector<1x64xf32>
    %c0_8 = arith.constant 0 : index
    %c0_9 = arith.constant 0 : index
    %6 = vector.load %arg2[%c0_8, %c0_9] : memref<136x32xf32, #tpu.memory_space<vmem>>, vector<64x32xf32>
    %c64_10 = arith.constant 64 : index
    %c0_11 = arith.constant 0 : index
    %7 = vector.load %arg2[%c64_10, %c0_11] : memref<136x32xf32, #tpu.memory_space<vmem>>, vector<32x32xf32>
    %c96_12 = arith.constant 96 : index
    %c0_13 = arith.constant 0 : index
    %8 = vector.load %arg2[%c96_12, %c0_13] : memref<136x32xf32, #tpu.memory_space<vmem>>, vector<16x32xf32>
    %c112 = arith.constant 112 : index
    %c0_14 = arith.constant 0 : index
    %9 = vector.load %arg2[%c112, %c0_14] : memref<136x32xf32, #tpu.memory_space<vmem>>, vector<1x32xf32>
    %c120 = arith.constant 120 : index
    %c0_15 = arith.constant 0 : index
    %10 = vector.load %arg2[%c120, %c0_15] : memref<136x32xf32, #tpu.memory_space<vmem>>, vector<1x32xf32>
    %c128 = arith.constant 128 : index
    %c0_16 = arith.constant 0 : index
    %11 = vector.load %arg2[%c128, %c0_16] : memref<136x32xf32, #tpu.memory_space<vmem>>, vector<1x32xf32>
    %c0_17 = arith.constant 0 : index
    %c0_18 = arith.constant 0 : index
    %12 = vector.load %arg4[%c0_17, %c0_18] : memref<72x128xf32, #tpu.memory_space<vmem>>, vector<64x128xf32>
    %c64_19 = arith.constant 64 : index
    %c0_20 = arith.constant 0 : index
    %13 = vector.load %arg4[%c64_19, %c0_20] : memref<72x128xf32, #tpu.memory_space<vmem>>, vector<1x128xf32>
    %cst = arith.constant dense<0.000000e+00> : vector<8x64xf32>
    %14 = tpu.matmul %0, %2, %cst {dimension_numbers = #tpu.dot_dimension_numbers<[1], [0], [0], [1], [0, 0, 1, 1], [], []>} : vector<8x64xf32>, vector<64x64xf32>, vector<8x64xf32> -> vector<8x64xf32>
    %15 = vector.broadcast %4 : vector<1x64xf32> to vector<8x64xf32>
    %16 = arith.addf %14, %15 : vector<8x64xf32>
    %cst_21 = arith.constant 0.000000e+00 : f32
    %17 = vector.broadcast %cst_21 : f32 to vector<8x64xf32>
    %18 = arith.maximumf %16, %17 : vector<8x64xf32>
    %cst_22 = arith.constant dense<0.000000e+00> : vector<8x32xf32>
    %19 = tpu.matmul %18, %6, %cst_22 {dimension_numbers = #tpu.dot_dimension_numbers<[1], [0], [0], [1], [0, 0, 1, 1], [], []>} : vector<8x64xf32>, vector<64x32xf32>, vector<8x32xf32> -> vector<8x32xf32>
    %20 = vector.broadcast %9 : vector<1x32xf32> to vector<8x32xf32>
    %21 = arith.addf %19, %20 : vector<8x32xf32>
    %cst_23 = arith.constant 0.000000e+00 : f32
    %22 = vector.broadcast %cst_23 : f32 to vector<8x32xf32>
    %23 = arith.maximumf %21, %22 : vector<8x32xf32>
    %cst_24 = arith.constant dense<0.000000e+00> : vector<8x32xf32>
    %24 = tpu.matmul %23, %7, %cst_24 {dimension_numbers = #tpu.dot_dimension_numbers<[1], [0], [0], [1], [0, 0, 1, 1], [], []>} : vector<8x32xf32>, vector<32x32xf32>, vector<8x32xf32> -> vector<8x32xf32>
    %25 = vector.broadcast %10 : vector<1x32xf32> to vector<8x32xf32>
    %26 = arith.addf %24, %25 : vector<8x32xf32>
    %27 = vector.extract_strided_slice %26 {offsets = [0, 0], sizes = [8, 16], strides = [1, 1]} : vector<8x32xf32> to vector<8x16xf32>
    %28 = vector.extract_strided_slice %26 {offsets = [0, 16], sizes = [8, 16], strides = [1, 1]} : vector<8x32xf32> to vector<8x16xf32>
    %cst_25 = arith.constant 5.000000e-01 : f32
    %29 = vector.broadcast %cst_25 : f32 to vector<8x16xf32>
    %30 = arith.mulf %29, %28 : vector<8x16xf32>
    %31 = math.exp %30 : vector<8x16xf32>
    %32 = vector.shape_cast %1 : vector<40x16xf32> to vector<5x8x16xf32>
    %33 = vector.shape_cast %27 : vector<8x16xf32> to vector<1x8x16xf32>
    %34 = vector.shape_cast %31 : vector<8x16xf32> to vector<1x8x16xf32>
    %35 = vector.broadcast %34 : vector<1x8x16xf32> to vector<5x8x16xf32>
    %36 = arith.mulf %32, %35 : vector<5x8x16xf32>
    %37 = vector.broadcast %33 : vector<1x8x16xf32> to vector<5x8x16xf32>
    %38 = arith.addf %37, %36 : vector<5x8x16xf32>
    %39 = vector.shape_cast %38 : vector<5x8x16xf32> to vector<40x16xf32>
    %cst_26 = arith.constant dense<0.000000e+00> : vector<40x32xf32>
    %40 = tpu.matmul %39, %8, %cst_26 {dimension_numbers = #tpu.dot_dimension_numbers<[1], [0], [0], [1], [0, 0, 1, 1], [], []>} : vector<40x16xf32>, vector<16x32xf32>, vector<40x32xf32> -> vector<40x32xf32>
    %41 = vector.broadcast %11 : vector<1x32xf32> to vector<40x32xf32>
    %42 = arith.addf %40, %41 : vector<40x32xf32>
    %cst_27 = arith.constant 0.000000e+00 : f32
    %43 = vector.broadcast %cst_27 : f32 to vector<40x32xf32>
    %44 = arith.maximumf %42, %43 : vector<40x32xf32>
    %cst_28 = arith.constant dense<0.000000e+00> : vector<40x64xf32>
    %45 = tpu.matmul %44, %3, %cst_28 {dimension_numbers = #tpu.dot_dimension_numbers<[1], [0], [0], [1], [0, 0, 1, 1], [], []>} : vector<40x32xf32>, vector<32x64xf32>, vector<40x64xf32> -> vector<40x64xf32>
    %46 = vector.broadcast %5 : vector<1x64xf32> to vector<40x64xf32>
    %47 = arith.addf %45, %46 : vector<40x64xf32>
    %48 = math.tanh %47 : vector<40x64xf32>
    %cst_29 = arith.constant dense<0.000000e+00> : vector<40x128xf32>
    %49 = tpu.matmul %48, %12, %cst_29 {dimension_numbers = #tpu.dot_dimension_numbers<[1], [0], [0], [1], [0, 0, 1, 1], [], []>} : vector<40x64xf32>, vector<64x128xf32>, vector<40x128xf32> -> vector<40x128xf32>
    %50 = vector.broadcast %13 : vector<1x128xf32> to vector<40x128xf32>
    %51 = arith.addf %49, %50 : vector<40x128xf32>
    %52 = vector.extract_strided_slice %51 {offsets = [0, 0], sizes = [8, 128], strides = [1, 1]} : vector<40x128xf32> to vector<8x128xf32>
    %c0_30 = arith.constant 0 : index
    %c0_31 = arith.constant 0 : index
    %53 = vector.load %arg5[%c0_30, %c0_31] : memref<8x128xf32, #tpu.memory_space<vmem>>, vector<8x128xf32>
    tpu.vector_store %arg5[%c0_30, %c0_31], %52 {strides = array<i32>} : memref<8x128xf32, #tpu.memory_space<vmem>>, vector<8x128xf32>,
    %c0_32 = arith.constant 0 : index
    %c0_33 = arith.constant 0 : index
    %54 = vector.load %arg6[%c0_32, %c0_33] : memref<8x32xf32, #tpu.memory_space<vmem>>, vector<8x32xf32>
    tpu.vector_store %arg6[%c0_32, %c0_33], %26 {strides = array<i32>} : memref<8x32xf32, #tpu.memory_space<vmem>>, vector<8x32xf32>,
    %55 = vector.shape_cast %51 : vector<40x128xf32> to vector<5x8x128xf32>
    %56 = vector.extract_strided_slice %55 {offsets = [0, 0, 0], sizes = [5, 8, 64], strides = [1, 1, 1]} : vector<5x8x128xf32> to vector<5x8x64xf32>
    %57 = vector.extract_strided_slice %55 {offsets = [0, 0, 64], sizes = [5, 8, 64], strides = [1, 1, 1]} : vector<5x8x128xf32> to vector<5x8x64xf32>
    %58 = vector.shape_cast %0 : vector<8x64xf32> to vector<1x8x64xf32>
    %59 = vector.broadcast %58 : vector<1x8x64xf32> to vector<5x8x64xf32>
    %60 = arith.subf %59, %56 : vector<5x8x64xf32>
    %61 = arith.mulf %60, %60 : vector<5x8x64xf32>
    %cst_34 = arith.constant 0.000000e+00 : f32
    %62 = vector.broadcast %cst_34 : f32 to vector<5x8x64xf32>
    %63 = arith.subf %62, %57 : vector<5x8x64xf32>
    %64 = math.exp %63 : vector<5x8x64xf32>
    %65 = arith.mulf %61, %64 : vector<5x8x64xf32>
    %66 = arith.addf %57, %65 : vector<5x8x64xf32>
    %cst_35 = arith.constant dense<0.000000e+00> : vector<5x8xf32>
    %67 = vector.multi_reduction <add>, %66, %cst_35 [2] : vector<5x8x64xf32> to vector<5x8xf32>
    %68 = vector.shape_cast %67 : vector<5x8xf32> to vector<5x8x1xf32>
    %69 = arith.mulf %32, %32 : vector<5x8x16xf32>
    %70 = arith.mulf %38, %38 : vector<5x8x16xf32>
    %71 = arith.subf %69, %70 : vector<5x8x16xf32>
    %cst_36 = arith.constant dense<0.000000e+00> : vector<5x8xf32>
    %72 = vector.multi_reduction <add>, %71, %cst_36 [2] : vector<5x8x16xf32> to vector<5x8xf32>
    %73 = vector.shape_cast %72 : vector<5x8xf32> to vector<5x8x1xf32>
    %cst_37 = arith.constant dense<0.000000e+00> : vector<8xf32>
    %74 = vector.multi_reduction <add>, %28, %cst_37 [1] : vector<8x16xf32> to vector<8xf32>
    %75 = vector.shape_cast %74 : vector<8xf32> to vector<8x1xf32>
    %cst_38 = arith.constant -5.000000e-01 : f32
    %76 = vector.broadcast %cst_38 : f32 to vector<5x8x1xf32>
    %77 = arith.mulf %76, %68 : vector<5x8x1xf32>
    %78 = vector.shape_cast %75 : vector<8x1xf32> to vector<1x8x1xf32>
    %79 = vector.broadcast %78 : vector<1x8x1xf32> to vector<5x8x1xf32>
    %80 = arith.addf %73, %79 : vector<5x8x1xf32>
    %cst_39 = arith.constant 5.000000e-01 : f32
    %81 = vector.broadcast %cst_39 : f32 to vector<5x8x1xf32>
    %82 = arith.mulf %81, %80 : vector<5x8x1xf32>
    %83 = arith.addf %77, %82 : vector<5x8x1xf32>
    %cst_40 = arith.constant 58.8120651 : f32
    %84 = vector.broadcast %cst_40 : f32 to vector<5x8x1xf32>
    %85 = arith.subf %83, %84 : vector<5x8x1xf32>
    %86 = vector.extract_strided_slice %85 {offsets = [0, 0, 0], sizes = [1, 8, 1], strides = [1, 1, 1]} : vector<5x8x1xf32> to vector<1x8x1xf32>
    %87 = vector.shape_cast %86 : vector<1x8x1xf32> to vector<8x1xf32>
    %88 = vector.extract_strided_slice %85 {offsets = [1, 0, 0], sizes = [1, 8, 1], strides = [1, 1, 1]} : vector<5x8x1xf32> to vector<1x8x1xf32>
    %89 = vector.shape_cast %88 : vector<1x8x1xf32> to vector<8x1xf32>
    %90 = arith.maximumf %87, %89 : vector<8x1xf32>
    %91 = vector.extract_strided_slice %85 {offsets = [2, 0, 0], sizes = [1, 8, 1], strides = [1, 1, 1]} : vector<5x8x1xf32> to vector<1x8x1xf32>
    %92 = vector.shape_cast %91 : vector<1x8x1xf32> to vector<8x1xf32>
    %93 = arith.maximumf %90, %92 : vector<8x1xf32>
    %94 = vector.extract_strided_slice %85 {offsets = [3, 0, 0], sizes = [1, 8, 1], strides = [1, 1, 1]} : vector<5x8x1xf32> to vector<1x8x1xf32>
    %95 = vector.shape_cast %94 : vector<1x8x1xf32> to vector<8x1xf32>
    %96 = arith.maximumf %93, %95 : vector<8x1xf32>
    %97 = vector.extract_strided_slice %85 {offsets = [4, 0, 0], sizes = [1, 8, 1], strides = [1, 1, 1]} : vector<5x8x1xf32> to vector<1x8x1xf32>
    %98 = vector.shape_cast %97 : vector<1x8x1xf32> to vector<8x1xf32>
    %99 = arith.maximumf %96, %98 : vector<8x1xf32>
    %100 = vector.extract_strided_slice %85 {offsets = [0, 0, 0], sizes = [1, 8, 1], strides = [1, 1, 1]} : vector<5x8x1xf32> to vector<1x8x1xf32>
    %101 = vector.shape_cast %100 : vector<1x8x1xf32> to vector<8x1xf32>
    %102 = arith.subf %101, %99 : vector<8x1xf32>
    %103 = math.exp %102 : vector<8x1xf32>
    %104 = vector.extract_strided_slice %85 {offsets = [1, 0, 0], sizes = [1, 8, 1], strides = [1, 1, 1]} : vector<5x8x1xf32> to vector<1x8x1xf32>
    %105 = vector.shape_cast %104 : vector<1x8x1xf32> to vector<8x1xf32>
    %106 = arith.subf %105, %99 : vector<8x1xf32>
    %107 = math.exp %106 : vector<8x1xf32>
    %108 = arith.addf %103, %107 : vector<8x1xf32>
    %109 = vector.extract_strided_slice %85 {offsets = [2, 0, 0], sizes = [1, 8, 1], strides = [1, 1, 1]} : vector<5x8x1xf32> to vector<1x8x1xf32>
    %110 = vector.shape_cast %109 : vector<1x8x1xf32> to vector<8x1xf32>
    %111 = arith.subf %110, %99 : vector<8x1xf32>
    %112 = math.exp %111 : vector<8x1xf32>
    %113 = arith.addf %108, %112 : vector<8x1xf32>
    %114 = vector.extract_strided_slice %85 {offsets = [3, 0, 0], sizes = [1, 8, 1], strides = [1, 1, 1]} : vector<5x8x1xf32> to vector<1x8x1xf32>
    %115 = vector.shape_cast %114 : vector<1x8x1xf32> to vector<8x1xf32>
    %116 = arith.subf %115, %99 : vector<8x1xf32>
    %117 = math.exp %116 : vector<8x1xf32>
    %118 = arith.addf %113, %117 : vector<8x1xf32>
    %119 = vector.extract_strided_slice %85 {offsets = [4, 0, 0], sizes = [1, 8, 1], strides = [1, 1, 1]} : vector<5x8x1xf32> to vector<1x8x1xf32>
    %120 = vector.shape_cast %119 : vector<1x8x1xf32> to vector<8x1xf32>
    %121 = arith.subf %120, %99 : vector<8x1xf32>
    %122 = math.exp %121 : vector<8x1xf32>
    %123 = arith.addf %118, %122 : vector<8x1xf32>
    %124 = math.log %123 : vector<8x1xf32>
    %125 = arith.addf %99, %124 : vector<8x1xf32>
    %cst_41 = arith.constant 1.60943794 : f32
    %126 = vector.broadcast %cst_41 : f32 to vector<8x1xf32>
    %127 = arith.subf %125, %126 : vector<8x1xf32>
    %128 = vector.shape_cast %127 : vector<8x1xf32> to vector<1x8x1xf32>
    %cst_42 = arith.constant dense<0.000000e+00> : vector<1xf32>
    %129 = vector.multi_reduction <add>, %128, %cst_42 [1, 2] : vector<1x8x1xf32> to vector<1xf32>
    %130 = vector.shape_cast %129 : vector<1xf32> to vector<1x1x1xf32>
    %131 = vector.extract %130[0, 0, 0] : f32 from vector<1x1x1xf32>
    %cst_43 = arith.constant 0.000000e+00 : f32
    %132 = arith.subf %cst_43, %131 : f32
    %cst_44 = arith.constant 8.000000e+00 : f32
    %133 = arith.divf %132, %cst_44 : f32
    %c0_45 = arith.constant 0 : index
    %c0_46 = arith.constant 0 : index
    %134 = memref.load %arg7[%c0_45, %c0_46] : memref<1x1xf32, #tpu.memory_space<smem>>
    memref.store %133, %arg7[%c0_45, %c0_46] : memref<1x1xf32, #tpu.memory_space<smem>>
    return
  }
}

</mosaic_0001>

<llo_original>
// kernel: iwae_forward.1
$region0: #{iwae_forward.1}
  #allocation0 [shape = 'u32[]', space=smem, size = 0x4, offset = 0x4, fixed_abs, tag = 'smem constant byte address 0x4 - core index']
  #allocation1 [shape = 'u32[72,128]{1,0:T(1,128)}', space=vmem, size = 0x9000, scoped, tag = 'internal scratch']
  %s0 = inlined_call_operand.vmem [shape: f32[8,64], index: 0, kind: input, shape index: {}]
  %s1 = inlined_call_operand.vmem [shape: f32[40,16], index: 1, kind: input, shape index: {}]
  %s2 = inlined_call_operand.vmem [shape: f32[136,32], index: 2, kind: input, shape index: {}]
  %s3 = inlined_call_operand.vmem [shape: f32[112,64], index: 3, kind: input, shape index: {}]
  %s4 = inlined_call_operand.vmem [shape: f32[72,128], index: 4, kind: input, shape index: {}]
  %s5 = inlined_call_operand.vmem [shape: f32[8,128], index: 5, kind: output, shape index: {0}]
  %s6 = inlined_call_operand.vmem [shape: f32[8,32], index: 6, kind: output, shape index: {1}]
  %s7 = inlined_call_operand.hbm [shape: f32[1,1], index: 7, kind: output, shape index: {2}]
  %8 = xla_tuple %s5, %s6, %s7
  %s9 = sld [smem:[#allocation0]]
  $region46: #{iwae_forward.1} parent=0
    _
  %s11 = ssub.s32 1, %s9
  %s12 = scalar_select 0, %s11, %s9
  $region1: #{iwae_forward.1} parent=0
    #allocation2 [shape = 'u8[512]{0}', space=smem, size = 0x200, scoped, tag = 'output window, operand 2, single buffered']
    #allocation3 [shape = 's32[1]{0}', space=sflag, size = 0x4, scoped, tag = 'scoped memory for iwae_forward.1']
    %13 = vsyncpa [#allocation3], 0
    // Predicated region
    $region2: #{iwae_forward.1} parent=1 // pred_check
      _
    $region3: #{iwae_forward.1} parent=1 // pred_check_branch
      %15 = sbr.rel (0) target = $region5
    $region4: #{iwae_forward.1} parent=1 // pred_region
      _
    $region5: #{iwae_forward.1} parent=1 // pred_fallthru
      _
    // Predicated region
    $region6: #{iwae_forward.1} parent=1 // pred_check
      _
    $region7: #{iwae_forward.1} parent=1 // pred_check_branch
      %17 = sbr.rel (0) target = $region9
    $region8: #{iwae_forward.1} parent=1 // pred_region
      _
    $region9: #{iwae_forward.1} parent=1 // pred_fallthru
      _
    // Predicated region
    $region10: #{iwae_forward.1} parent=1 // pred_check
      _
    $region11: #{iwae_forward.1} parent=1 // pred_check_branch
      %19 = sbr.rel (0) target = $region13
    $region12: #{iwae_forward.1} parent=1 // pred_region
      _
    $region13: #{iwae_forward.1} parent=1 // pred_fallthru
      _
    // Predicated region
    $region14: #{iwae_forward.1} parent=1 // pred_check
      _
    $region15: #{iwae_forward.1} parent=1 // pred_check_branch
      %21 = sbr.rel (0) target = $region17
    $region16: #{iwae_forward.1} parent=1 // pred_region
      _
    $region17: #{iwae_forward.1} parent=1 // pred_fallthru
      _
    // Predicated region
    $region18: #{iwae_forward.1} parent=1 // pred_check
      _
    $region19: #{iwae_forward.1} parent=1 // pred_check_branch
      %23 = sbr.rel (0) target = $region21
    $region20: #{iwae_forward.1} parent=1 // pred_region
      _
    $region21: #{iwae_forward.1} parent=1 // pred_fallthru
      _
    %v24 = vld [vmem:[%s0] sm:$0xff]
    %v25 = vld [vmem:[%s1] sm:$0xff]
    %v26 = vld [vmem:[%s1 + $0x8] sm:$0xff]
    %v27 = vld [vmem:[%s1 + $0x10] sm:$0xff]
    %v28 = vld [vmem:[%s1 + $0x18] sm:$0xff]
    %v29 = vld [vmem:[%s1 + $0x20] sm:$0xff]
    %v30 = vld [vmem:[%s3] sm:$0xff]
    %v31 = vld [vmem:[%s3 + $0x8] sm:$0xff]
    %v32 = vld [vmem:[%s3 + $0x10] sm:$0xff]
    %v33 = vld [vmem:[%s3 + $0x18] sm:$0xff]
    %v34 = vld [vmem:[%s3 + $0x20] sm:$0xff]
    %v35 = vld [vmem:[%s3 + $0x28] sm:$0xff]
    %v36 = vld [vmem:[%s3 + $0x30] sm:$0xff]
    %v37 = vld [vmem:[%s3 + $0x38] sm:$0xff]
    %v38 = vld [vmem:[%s3 + $0x40] sm:$0xff]
    %v39 = vld [vmem:[%s3 + $0x48] sm:$0xff]
    %v40 = vld [vmem:[%s3 + $0x50] sm:$0xff]
    %v41 = vld [vmem:[%s3 + $0x58] sm:$0xff]
    %v42 = vld [vmem:[%s3 + $0x60] sm:$0x1]
    %v43 = vld [vmem:[%s3 + $0x68] sm:$0x1]
    %v44 = vld [vmem:[%s2] sm:$0xff]
    %v45 = vld [vmem:[%s2 + $0x8] sm:$0xff]
    %v46 = vld [vmem:[%s2 + $0x10] sm:$0xff]
    %v47 = vld [vmem:[%s2 + $0x18] sm:$0xff]
    %v48 = vld [vmem:[%s2 + $0x20] sm:$0xff]
    %v49 = vld [vmem:[%s2 + $0x28] sm:$0xff]
    %v50 = vld [vmem:[%s2 + $0x30] sm:$0xff]
    %v51 = vld [vmem:[%s2 + $0x38] sm:$0xff]
    %v52 = vld [vmem:[%s2 + $0x40] sm:$0xff]
    %v53 = vld [vmem:[%s2 + $0x48] sm:$0xff]
    %v54 = vld [vmem:[%s2 + $0x50] sm:$0xff]
    %v55 = vld [vmem:[%s2 + $0x58] sm:$0xff]
    %v56 = vld [vmem:[%s2 + $0x60] sm:$0xff]
    %v57 = vld [vmem:[%s2 + $0x68] sm:$0xff]
    %v58 = vld [vmem:[%s2 + $0x70] sm:$0x1]
    %v59 = vld [vmem:[%s2 + $0x78] sm:$0x1]
    %v60 = vld [vmem:[%s2 + $0x80] sm:$0x1]
    %v61 = vld [vmem:[%s4] sm:$0xff]
    %v62 = vld [vmem:[%s4 + $0x8] sm:$0xff]
    %v63 = vld [vmem:[%s4 + $0x10] sm:$0xff]
    %v64 = vld [vmem:[%s4 + $0x18] sm:$0xff]
    %v65 = vld [vmem:[%s4 + $0x20] sm:$0xff]
    %v66 = vld [vmem:[%s4 + $0x28] sm:$0xff]
    %v67 = vld [vmem:[%s4 + $0x30] sm:$0xff]
    %v68 = vld [vmem:[%s4 + $0x38] sm:$0xff]
    %v69 = vld [vmem:[%s4 + $0x40] sm:$0x1]
    %v70 = vperm.slane %v42, 0
    %vm71 = vcmask 523264
    %v73 = vsel %vm71, %v24, 0
    %75 = vmatpush.msra.mxu0 0.0
    %76 = vmatpush.msra.mxu0 0.0
    %77 = vmatpush.msra.mxu0 0.0
    %78 = vmatpush.msra.mxu0 0.0
    %79 = vmatpush.msra.mxu0 0.0
    %80 = vmatpush.msra.mxu0 0.0
    %81 = vmatpush.msra.mxu0 0.0
    %82 = vmatpush.msra.mxu0 0.0
    %83 = vmatpush.msra.mxu0 %v37
    %84 = vmatpush.msra.mxu0 %v36
    %85 = vmatpush.msra.mxu0 %v35
    %86 = vmatpush.msra.mxu0 %v34
    %87 = vmatpush.msra.mxu0 %v33
    %88 = vmatpush.msra.mxu0 %v32
    %89 = vmatpush.msra.mxu0 %v31
    %90 = vmatpush.msra.mxu0 %v30
    %91 = vmatmul.f32.gmra.mxu0 %v73
    %v92 = vpop.f32.mrf.mxu0
    %v93 = vadd.f32 %v70, %v92
    %94 = vdwg.mxu0
    %v95 = vmax.f32 %v93, 0.0
    %v96 = vperm.slane %v58, 0
    %v98 = vsel %vm71, %v95, 0
    %100 = vmatpush.msra.mxu0 0.0
    %101 = vmatpush.msra.mxu0 0.0
    %102 = vmatpush.msra.mxu0 0.0
    %103 = vmatpush.msra.mxu0 0.0
    %104 = vmatpush.msra.mxu0 0.0
    %105 = vmatpush.msra.mxu0 0.0
    %106 = vmatpush.msra.mxu0 0.0
    %107 = vmatpush.msra.mxu0 0.0
    %108 = vmatpush.msra.mxu0 %v51
    %109 = vmatpush.msra.mxu0 %v50
    %110 = vmatpush.msra.mxu0 %v49
    %111 = vmatpush.msra.mxu0 %v48
    %112 = vmatpush.msra.mxu0 %v47
    %113 = vmatpush.msra.mxu0 %v46
    %114 = vmatpush.msra.mxu0 %v45
    %115 = vmatpush.msra.mxu0 %v44
    %116 = vmatmul.f32.gmra.mxu0 %v98
    %v117 = vpop.f32.mrf.mxu0
    %v118 = vadd.f32 %v96, %v117
    %119 = vdwg.mxu0
    %v120 = vmax.f32 %v118, 0.0
    %v121 = vperm.slane %v59, 0
    %vm122 = vcmask 261120
    %v124 = vsel %vm122, %v120, 0
    %126 = vmatpush.msra.mxu0 0.0
    %127 = vmatpush.msra.mxu0 0.0
    %128 = vmatpush.msra.mxu0 0.0
    %129 = vmatpush.msra.mxu0 0.0
    %130 = vmatpush.msra.mxu0 0.0
    %131 = vmatpush.msra.mxu0 0.0
    %132 = vmatpush.msra.mxu0 0.0
    %133 = vmatpush.msra.mxu0 0.0
    %134 = vmatpush.msra.mxu0 0.0
    %135 = vmatpush.msra.mxu0 0.0
    %136 = vmatpush.msra.mxu0 0.0
    %137 = vmatpush.msra.mxu0 0.0
    %138 = vmatpush.msra.mxu0 %v55
    %139 = vmatpush.msra.mxu0 %v54
    %140 = vmatpush.msra.mxu0 %v53
    %141 = vmatpush.msra.mxu0 %v52
    %142 = vmatmul.f32.gmra.mxu0 %v124
    %v143 = vpop.f32.mrf.mxu0
    %v144 = vadd.f32 %v121, %v143
    %145 = vdwg.mxu0
    %v146 = vmul.f32 %v144, 0.5
    %v147 = vmul.f32 %v146, 1.442695
    %v148 = vpow.pop %v147
    %150 = vrot.lane.b32.xlu0 %v148, 112
    %v151 = vpop.permute.xlu0 %150
    %v153 = vmul.f32 %v25, %v151
    %v154 = vmul.f32 %v26, %v151
    %v155 = vmul.f32 %v27, %v151
    %v156 = vmul.f32 %v28, %v151
    %v157 = vmul.f32 %v29, %v151
    %v158 = vadd.f32 %v144, %v153
    %v159 = vadd.f32 %v144, %v154
    %v160 = vadd.f32 %v144, %v155
    %v161 = vadd.f32 %v144, %v156
    %v162 = vadd.f32 %v144, %v157
    %v163 = vperm.slane %v60, 0
    %vm164 = vcmask 130048
    %v166 = vsel %vm164, %v158, 0
    %v169 = vsel %vm164, %v159, 0
    %v172 = vsel %vm164, %v160, 0
    %v175 = vsel %vm164, %v161, 0
    %v178 = vsel %vm164, %v162, 0
    %180 = vmatpush.msra.mxu0 0.0
    %181 = vmatpush.msra.mxu0 0.0
    %182 = vmatpush.msra.mxu0 0.0
    %183 = vmatpush.msra.mxu0 0.0
    %184 = vmatpush.msra.mxu0 0.0
    %185 = vmatpush.msra.mxu0 0.0
    %186 = vmatpush.msra.mxu0 0.0
    %187 = vmatpush.msra.mxu0 0.0
    %188 = vmatpush.msra.mxu0 0.0
    %189 = vmatpush.msra.mxu0 0.0
    %190 = vmatpush.msra.mxu0 0.0
    %191 = vmatpush.msra.mxu0 0.0
    %192 = vmatpush.msra.mxu0 0.0
    %193 = vmatpush.msra.mxu0 0.0
    %194 = vmatpush.msra.mxu0 %v57
    %195 = vmatpush.msra.mxu0 %v56
    %196 = vmatmul.f32.gmra.mxu0 %v166
    %v197 = vpop.f32.mrf.mxu0
    %v198 = vadd.f32 %v163, %v197
    %199 = vmatmul.f32.gmra.mxu0 %v169
    %v200 = vpop.f32.mrf.mxu0
    %v201 = vadd.f32 %v163, %v200
    %202 = vmatmul.f32.gmra.mxu0 %v172
    %v203 = vpop.f32.mrf.mxu0
    %v204 = vadd.f32 %v163, %v203
    %205 = vmatmul.f32.gmra.mxu0 %v175
    %v206 = vpop.f32.mrf.mxu0
    %v207 = vadd.f32 %v163, %v206
    %208 = vmatmul.f32.gmra.mxu0 %v178
    %v209 = vpop.f32.mrf.mxu0
    %v210 = vadd.f32 %v163, %v209
    %211 = vdwg.mxu0
    %v212 = vmax.f32 %v198, 0.0
    %v213 = vmax.f32 %v201, 0.0
    %v214 = vmax.f32 %v204, 0.0
    %v215 = vmax.f32 %v207, 0.0
    %v216 = vmax.f32 %v210, 0.0
    %v217 = vperm.slane %v43, 0
    %v219 = vsel %vm122, %v212, 0
    %v222 = vsel %vm122, %v213, 0
    %v225 = vsel %vm122, %v214, 0
    %v228 = vsel %vm122, %v215, 0
    %v231 = vsel %vm122, %v216, 0
    %233 = vmatpush.msra.mxu0 0.0
    %234 = vmatpush.msra.mxu0 0.0
    %235 = vmatpush.msra.mxu0 0.0
    %236 = vmatpush.msra.mxu0 0.0
    %237 = vmatpush.msra.mxu0 0.0
    %238 = vmatpush.msra.mxu0 0.0
    %239 = vmatpush.msra.mxu0 0.0
    %240 = vmatpush.msra.mxu0 0.0
    %241 = vmatpush.msra.mxu0 0.0
    %242 = vmatpush.msra.mxu0 0.0
    %243 = vmatpush.msra.mxu0 0.0
    %244 = vmatpush.msra.mxu0 0.0
    %245 = vmatpush.msra.mxu0 %v41
    %246 = vmatpush.msra.mxu0 %v40
    %247 = vmatpush.msra.mxu0 %v39
    %248 = vmatpush.msra.mxu0 %v38
    %249 = vmatmul.f32.gmra.mxu0 %v219
    %v250 = vpop.f32.mrf.mxu0
    %v251 = vadd.f32 %v217, %v250
    %252 = vmatmul.f32.gmra.mxu0 %v222
    %v253 = vpop.f32.mrf.mxu0
    %v254 = vadd.f32 %v217, %v253
    %255 = vmatmul.f32.gmra.mxu0 %v225
    %v256 = vpop.f32.mrf.mxu0
    %v257 = vadd.f32 %v217, %v256
    %258 = vmatmul.f32.gmra.mxu0 %v228
    %v259 = vpop.f32.mrf.mxu0
    %v260 = vadd.f32 %v217, %v259
    %261 = vmatmul.f32.gmra.mxu0 %v231
    %v262 = vpop.f32.mrf.mxu0
    %v263 = vadd.f32 %v217, %v262
    %264 = vdwg.mxu0
    %v265 = vtanh.pop %v251
    %v266 = vtanh.pop %v254
    %v267 = vtanh.pop %v257
    %v268 = vtanh.pop %v260
    %v269 = vtanh.pop %v263
    %v270 = vperm.slane %v69, 0
    %v272 = vsel %vm71, %v265, 0
    %v275 = vsel %vm71, %v266, 0
    %v278 = vsel %vm71, %v267, 0
    %v281 = vsel %vm71, %v268, 0
    %v284 = vsel %vm71, %v269, 0
    %286 = vmatpush.msra.mxu0 0.0
    %287 = vmatpush.msra.mxu0 0.0
    %288 = vmatpush.msra.mxu0 0.0
    %289 = vmatpush.msra.mxu0 0.0
    %290 = vmatpush.msra.mxu0 0.0
    %291 = vmatpush.msra.mxu0 0.0
    %292 = vmatpush.msra.mxu0 0.0
    %293 = vmatpush.msra.mxu0 0.0
    %294 = vmatpush.msra.mxu0 %v68
    %295 = vmatpush.msra.mxu0 %v67
    %296 = vmatpush.msra.mxu0 %v66
    %297 = vmatpush.msra.mxu0 %v65
    %298 = vmatpush.msra.mxu0 %v64
    %299 = vmatpush.msra.mxu0 %v63
    %300 = vmatpush.msra.mxu0 %v62
    %301 = vmatpush.msra.mxu0 %v61
    %302 = vmatmul.f32.gmra.mxu0 %v272
    %v303 = vpop.f32.mrf.mxu0
    %v304 = vadd.f32 %v270, %v303
    %305 = vmatmul.f32.gmra.mxu0 %v275
    %v306 = vpop.f32.mrf.mxu0
    %v307 = vadd.f32 %v270, %v306
    %308 = vmatmul.f32.gmra.mxu0 %v278
    %v309 = vpop.f32.mrf.mxu0
    %v310 = vadd.f32 %v270, %v309
    %311 = vmatmul.f32.gmra.mxu0 %v281
    %v312 = vpop.f32.mrf.mxu0
    %v313 = vadd.f32 %v270, %v312
    %314 = vmatmul.f32.gmra.mxu0 %v284
    %v315 = vpop.f32.mrf.mxu0
    %v316 = vadd.f32 %v270, %v315
    %317 = vdwg.mxu0
    %318 = vst [vmem:[%s5] sm:$0xff] %v304
    %319 = vst.msk [vmem:[%s6] sm:$0xff] %vm122, %v144
    %v320 = vsub.f32 %v24, %v304
    %v321 = vsub.f32 %v24, %v307
    %v322 = vsub.f32 %v24, %v310
    %v323 = vsub.f32 %v24, %v313
    %v324 = vsub.f32 %v24, %v316
    %v325 = vmul.f32 %v320, %v320
    %v326 = vmul.f32 %v321, %v321
    %v327 = vmul.f32 %v322, %v322
    %v328 = vmul.f32 %v323, %v323
    %v329 = vmul.f32 %v324, %v324
    %v330 = vsub.f32 0.0, %v304
    %v331 = vsub.f32 0.0, %v307
    %v332 = vsub.f32 0.0, %v310
    %v333 = vsub.f32 0.0, %v313
    %v334 = vsub.f32 0.0, %v316
    %v335 = vmul.f32 %v330, 1.442695
    %v336 = vpow.pop %v335
    %v337 = vmul.f32 %v331, 1.442695
    %v338 = vpow.pop %v337
    %v339 = vmul.f32 %v332, 1.442695
    %v340 = vpow.pop %v339
    %v341 = vmul.f32 %v333, 1.442695
    %v342 = vpow.pop %v341
    %v343 = vmul.f32 %v334, 1.442695
    %v344 = vpow.pop %v343
    %350 = vrot.lane.b32.xlu0 %v336, 64
    %v351 = vpop.permute.xlu0 %350
    %352 = vrot.lane.b32.xlu0 %v338, 64
    %v353 = vpop.permute.xlu0 %352
    %354 = vrot.lane.b32.xlu0 %v340, 64
    %v355 = vpop.permute.xlu0 %354
    %356 = vrot.lane.b32.xlu0 %v342, 64
    %v357 = vpop.permute.xlu0 %356
    %358 = vrot.lane.b32.xlu0 %v344, 64
    %v359 = vpop.permute.xlu0 %358
    %v365 = vmul.f32 %v325, %v351
    %v366 = vmul.f32 %v326, %v353
    %v367 = vmul.f32 %v327, %v355
    %v368 = vmul.f32 %v328, %v357
    %v369 = vmul.f32 %v329, %v359
    %375 = vrot.lane.b32.xlu0 %v365, 64
    %v376 = vpop.permute.xlu0 %375
    %377 = vrot.lane.b32.xlu0 %v366, 64
    %v378 = vpop.permute.xlu0 %377
    %379 = vrot.lane.b32.xlu0 %v367, 64
    %v380 = vpop.permute.xlu0 %379
    %381 = vrot.lane.b32.xlu0 %v368, 64
    %v382 = vpop.permute.xlu0 %381
    %383 = vrot.lane.b32.xlu0 %v369, 64
    %v384 = vpop.permute.xlu0 %383
    %v390 = vadd.f32 %v304, %v376
    %v391 = vadd.f32 %v307, %v378
    %v392 = vadd.f32 %v310, %v380
    %v393 = vadd.f32 %v313, %v382
    %v394 = vadd.f32 %v316, %v384
    %400 = vrot.lane.b32.xlu0 %v390, 64
    %v401 = vpop.permute.xlu0 %400
    %402 = vrot.lane.b32.xlu0 %v391, 64
    %v403 = vpop.permute.xlu0 %402
    %404 = vrot.lane.b32.xlu0 %v392, 64
    %v405 = vpop.permute.xlu0 %404
    %406 = vrot.lane.b32.xlu0 %v393, 64
    %v407 = vpop.permute.xlu0 %406
    %408 = vrot.lane.b32.xlu0 %v394, 64
    %v409 = vpop.permute.xlu0 %408
    %v415 = vsel %vm71, %v401, 0.0
    %416 = vadd.xlane.f32.xlu0 %v415
    %v417 = vpop.xlane.xlu0 %416
    %v418 = vsel %vm71, %v403, 0.0
    %419 = vadd.xlane.f32.xlu0 %v418
    %v420 = vpop.xlane.xlu0 %419
    %v421 = vsel %vm71, %v405, 0.0
    %422 = vadd.xlane.f32.xlu0 %v421
    %v423 = vpop.xlane.xlu0 %422
    %v424 = vsel %vm71, %v407, 0.0
    %425 = vadd.xlane.f32.xlu0 %v424
    %v426 = vpop.xlane.xlu0 %425
    %v427 = vsel %vm71, %v409, 0.0
    %428 = vadd.xlane.f32.xlu0 %v427
    %v429 = vpop.xlane.xlu0 %428
    %v430 = vmul.f32 %v25, %v25
    %v431 = vmul.f32 %v26, %v26
    %v432 = vmul.f32 %v27, %v27
    %v433 = vmul.f32 %v28, %v28
    %v434 = vmul.f32 %v29, %v29
    %v435 = vmul.f32 %v158, %v158
    %v436 = vmul.f32 %v159, %v159
    %v437 = vmul.f32 %v160, %v160
    %v438 = vmul.f32 %v161, %v161
    %v439 = vmul.f32 %v162, %v162
    %v440 = vsub.f32 %v430, %v435
    %v441 = vsub.f32 %v431, %v436
    %v442 = vsub.f32 %v432, %v437
    %v443 = vsub.f32 %v433, %v438
    %v444 = vsub.f32 %v434, %v439
    %v445 = vsel %vm164, %v440, 0.0
    %446 = vadd.xlane.f32.xlu0 %v445
    %v447 = vpop.xlane.xlu0 %446
    %v448 = vsel %vm164, %v441, 0.0
    %449 = vadd.xlane.f32.xlu0 %v448
    %v450 = vpop.xlane.xlu0 %449
    %v451 = vsel %vm164, %v442, 0.0
    %452 = vadd.xlane.f32.xlu0 %v451
    %v453 = vpop.xlane.xlu0 %452
    %v454 = vsel %vm164, %v443, 0.0
    %455 = vadd.xlane.f32.xlu0 %v454
    %v456 = vpop.xlane.xlu0 %455
    %v457 = vsel %vm164, %v444, 0.0
    %458 = vadd.xlane.f32.xlu0 %v457
    %v459 = vpop.xlane.xlu0 %458
    %461 = vrot.lane.b32.xlu0 %v144, 112
    %v462 = vpop.permute.xlu0 %461
    %v464 = vsel %vm164, %v462, 0.0
    %465 = vadd.xlane.f32.xlu0 %v464
    %v466 = vpop.xlane.xlu0 %465
    %v467 = vmul.f32 %v417, -0.5
    %v468 = vmul.f32 %v420, -0.5
    %v469 = vmul.f32 %v423, -0.5
    %v470 = vmul.f32 %v426, -0.5
    %v471 = vmul.f32 %v429, -0.5
    %v472 = vadd.f32 %v447, %v466
    %v473 = vadd.f32 %v450, %v466
    %v474 = vadd.f32 %v453, %v466
    %v475 = vadd.f32 %v456, %v466
    %v476 = vadd.f32 %v459, %v466
    %v477 = vmul.f32 %v472, 0.5
    %v478 = vmul.f32 %v473, 0.5
    %v479 = vmul.f32 %v474, 0.5
    %v480 = vmul.f32 %v475, 0.5
    %v481 = vmul.f32 %v476, 0.5
    %v482 = vadd.f32 %v467, %v477
    %v483 = vadd.f32 %v468, %v478
    %v484 = vadd.f32 %v469, %v479
    %v485 = vadd.f32 %v470, %v480
    %v486 = vadd.f32 %v471, %v481
    %v487 = vsub.f32 %v482, 58.812065
    %v488 = vsub.f32 %v483, 58.812065
    %v489 = vsub.f32 %v484, 58.812065
    %v490 = vsub.f32 %v485, 58.812065
    %v491 = vsub.f32 %v486, 58.812065
    %v492 = vmax.f32 %v487, %v488
    %v493 = vmax.f32 %v492, %v489
    %v494 = vmax.f32 %v493, %v490
    %v495 = vmax.f32 %v494, %v491
    %v496 = vsub.f32 %v487, %v495
    %v497 = vmul.f32 %v496, 1.442695
    %v498 = vpow.pop %v497
    %v499 = vsub.f32 %v488, %v495
    %v500 = vmul.f32 %v499, 1.442695
    %v501 = vpow.pop %v500
    %v502 = vadd.f32 %v498, %v501
    %v503 = vsub.f32 %v489, %v495
    %v504 = vmul.f32 %v503, 1.442695
    %v505 = vpow.pop %v504
    %v506 = vadd.f32 %v502, %v505
    %v507 = vsub.f32 %v490, %v495
    %v508 = vmul.f32 %v507, 1.442695
    %v509 = vpow.pop %v508
    %v510 = vadd.f32 %v506, %v509
    %v511 = vsub.f32 %v491, %v495
    %v512 = vmul.f32 %v511, 1.442695
    %v513 = vpow.pop %v512
    %v514 = vadd.f32 %v510, %v513
    %v515 = vlog2.pop %v514
    %v516 = vmul.f32 %v515, 0.6931472
    %v517 = vadd.f32 %v495, %v516
    %v518 = vsub.f32 %v517, 1.609438
    %vm519 = vcmask 7168
    %v520 = vsel %vm519, %v518, 0.0
    %521 = vadd.xlane.f32.xlu0 %v520
    %v522 = vpop.xlane.xlu0 %521
    %v523 = vrot.slane %v522, 4
    %v524 = vadd.f32 %v522, %v523
    %v525 = vrot.slane %v524, 2
    %v526 = vadd.f32 %v524, %v525
    %v527 = vrot.slane %v526, 1
    %v528 = vadd.f32 %v526, %v527
    %s529 = vtos %v528
    %s530 = ssub.f32 0.0, %s529
    %v531 = vrcp.pop 8.0
    %v532 = vmul.f32 8.0, %v531
    %v533 = vsub.f32 1.0, %v532
    %v534 = vmul.f32 %v531, %v533
    %v535 = vadd.f32 %v531, %v534
    %vm536 = vweird.f32 %v531
    %v537 = vsel %vm536, %v531, %v535
    %s538 = vtos %v537
    %s539 = smul.f32 %s530, %s538
    %s540 = scalar_lea.smem [#allocation2], 0
    %541 = sst [smem:[%s540]] %s539
    // Predicated region
    $region22: #{iwae_forward.1} parent=1 // pred_check
      _
    $region23: #{iwae_forward.1} parent=1 // pred_check_branch
      %543 = sbr.rel (0) target = $region25
    $region24: #{iwae_forward.1} parent=1 // pred_region
      _
    $region25: #{iwae_forward.1} parent=1 // pred_fallthru
      _
    // Predicated region
    $region26: #{iwae_forward.1} parent=1 // pred_check
      _
    $region27: #{iwae_forward.1} parent=1 // pred_check_branch
      %545 = sbr.rel (0) target = $region29
    $region28: #{iwae_forward.1} parent=1 // pred_region
      _
    $region29: #{iwae_forward.1} parent=1 // pred_fallthru
      _
    // Predicated region
    $region30: #{iwae_forward.1} parent=1 // pred_check
      _
    $region31: #{iwae_forward.1} parent=1 // pred_check_branch
      %547 = sbr.rel (0) target = $region33
    $region32: #{iwae_forward.1} parent=1 // pred_region
      %549 = vsyncadd [#allocation3], 0
      %s551 = sshll.u32 %s7, 4
      %s552 = int_to_ptr.hbm [resolvable:$true] %s551
      %554 = dma.smem_to_hbm [#allocation2], 16, %s552, [#allocation3]
    $region33: #{iwae_forward.1} parent=1 // pred_fallthru
      _
    // Predicated region
    $region34: #{iwae_forward.1} parent=1 // pred_check
      _
    $region35: #{iwae_forward.1} parent=1 // pred_check_branch
      %556 = sbr.rel (0) target = $region37
    $region36: #{iwae_forward.1} parent=1 // pred_region
      _
    $region37: #{iwae_forward.1} parent=1 // pred_fallthru
      _
    // Predicated region
    $region38: #{iwae_forward.1} parent=1 // pred_check
      _
    $region39: #{iwae_forward.1} parent=1 // pred_check_branch
      %558 = sbr.rel (0) target = $region41
    $region40: #{iwae_forward.1} parent=1 // pred_region
      _
    $region41: #{iwae_forward.1} parent=1 // pred_fallthru
      _
    // Predicated region
    $region42: #{iwae_forward.1} parent=1 // pred_check
      _
    $region43: #{iwae_forward.1} parent=1 // pred_check_branch
      %560 = sbr.rel (0) target = $region45
    $region44: #{iwae_forward.1} parent=1 // pred_region
      %562 = dma.done [#allocation3], 16
    $region45: #{iwae_forward.1} parent=1 // pred_fallthru
      _
    %563 = sfence
    %564 = vsyncpa [#allocation3], 1

</llo_original>
